<compile_context>
chip_gen: v5e
topology: v5e:2x2
jax: 0.10.0
libtpu: 0.0.40
codegen_flags: <defaults>
</compile_context>

<pallas_src>
import jax
import jax.numpy as jnp
from jax.experimental import pallas as pl
from jax.experimental.pallas import tpu as pltpu


def _transition_kernel(x00_ref, x01_ref, x10_ref, x11_ref,
                       scale_ref, shift_ref, w_ref, b_ref, o_ref):
    # x??_ref  : (TM, Cin)       -- the 4 positions of each 2x2 pooling window
    # scale_ref: (1, Cin)  f32   -- 0.25 * gamma / sqrt(var + eps)
    # shift_ref: (1, Cin)  f32   -- 0.25 * (beta - mean * gamma / sqrt(var+eps))
    # w_ref    : (Cin, Cout_pad) -- 1x1 conv weight (compute dtype)
    # b_ref    : (1, Cout_pad) f32 -- conv bias (zero padded)
    # o_ref    : (TM, Cout_pad) f32
    s = scale_ref[...]
    t = shift_ref[...]
    # BN + ReLU per pixel in f32 (v5e VPU has no bf16 ALU; upcast in-register),
    # summed over the 4 window positions.  The 0.25 avg-pool factor is already
    # folded into scale/shift, so no extra multiply is needed here.
    acc = jnp.maximum(x00_ref[...].astype(jnp.float32) * s + t, 0.0)
    acc += jnp.maximum(x01_ref[...].astype(jnp.float32) * s + t, 0.0)
    acc += jnp.maximum(x10_ref[...].astype(jnp.float32) * s + t, 0.0)
    acc += jnp.maximum(x11_ref[...].astype(jnp.float32) * s + t, 0.0)
    # 1x1 conv == channel matmul on the MXU (+ bias), accumulated in f32.
    o_ref[...] = (
        jnp.dot(acc.astype(w_ref.dtype), w_ref[...],
                preferred_element_type=jnp.float32)
        + b_ref[...]
    )


def _select_tile_m(M, Cin, Cout_pad, in_bytes, tm_target=512,
                   vmem_budget=24 * 1024 * 1024):
    """Largest TM <= tm_target whose pipelined VMEM footprint fits the budget.

    Budget (24 MiB) + vmem_limit_bytes = 32 MiB keeps us inside v5e/v6e physical
    VMEM (128 MiB) and v7x's 64 MiB with comfortable headroom.
    """
    tm = tm_target

    def footprint(t):
        return (2 * 4 * t * Cin * in_bytes        # 4 window inputs, double-buffered
                + 2 * t * Cout_pad * 4            # f32 output, double-buffered
                + 2 * Cin * Cout_pad * in_bytes   # weight (grid-invariant, still 2-buffered)
                + 4 * Cin * 4 + 2 * Cout_pad * 4) # scale / shift / bias

    while tm > 8 and footprint(tm) > vmem_budget:
        tm //= 2
    if M <= tm:
        return M      # single block == full dim (no 8-divisibility requirement)
    return tm


def transition_layer(x_nchw, gamma, beta, running_mean, running_var,
                     conv_w, conv_b, eps=1e-5, compute_dtype=jnp.float32,
                     tm_target=512):
    """Pallas TPU implementation of AvgPool2x2(Conv1x1(ReLU(BN_eval(x))))."""
    N, Cin, H, W = x_nchw.shape
    Cout = conv_w.shape[0]
    assert H % 2 == 0 and W % 2 == 0, "spatial dims must be even for 2x2 pool"
    Hp, Wp = H // 2, W // 2
    M = N * Hp * Wp
    in_bytes = jnp.dtype(compute_dtype).itemsize
    f32 = jnp.float32

    # ---- Fold BN running stats (and the 0.25 avg-pool factor) into scale/shift.
    inv_std = 1.0 / jnp.sqrt(running_var.astype(f32) + eps)
    scale = (0.25 * gamma.astype(f32) * inv_std).reshape(1, Cin)
    shift = (0.25 * (beta.astype(f32)
                     - running_mean.astype(f32) * gamma.astype(f32) * inv_std)
             ).reshape(1, Cin)

    # ---- Layout: one NCHW->NHWC boundary transpose (free in an NHWC-native
    # pipeline), then 4 strided window views -- no 6-D window-major transpose.
    x_nhwc = jnp.transpose(x_nchw, (0, 2, 3, 1)).astype(compute_dtype)
    xs = [x_nhwc[:, dh::2, dw::2, :].reshape(M, Cin)
          for dh in (0, 1) for dw in (0, 1)]

    # ---- Pad Cout up to a multiple of 128 so kernel stores are lane-dense.
    Cout_pad = -(-Cout // 128) * 128
    w = conv_w.reshape(Cout, Cin).T.astype(compute_dtype)      # (Cin, Cout)
    b = conv_b.astype(f32).reshape(1, Cout)
    if Cout_pad != Cout:
        w = jnp.pad(w, ((0, 0), (0, Cout_pad - Cout)))
        b = jnp.pad(b, ((0, 0), (0, Cout_pad - Cout)))

    # ---- Tile the pooled-pixel axis; pad M to a multiple of TM if needed.
    TM = _select_tile_m(M, Cin, Cout_pad, in_bytes, tm_target=tm_target)
    M_pad = -(-M // TM) * TM
    if M_pad != M:
        xs = [jnp.pad(xi, ((0, M_pad - M), (0, 0))) for xi in xs]
    grid = (M_pad // TM,)   # >= 2 parallel blocks when M > TM (v7x megacore)

    cost = pl.CostEstimate(
        flops=2 * M_pad * Cin * Cout_pad + 12 * M_pad * Cin,
        transcendentals=0,
        bytes_accessed=(4 * M_pad * Cin * in_bytes
                        + M_pad * Cout_pad * 4
                        + Cin * Cout_pad * in_bytes
                        + 2 * Cin * 4 + Cout_pad * 4),
    )

    row_spec = pl.BlockSpec((TM, Cin), lambda i: (i, 0))
    # NOTE: scale/shift/w/b are grid-invariant; they are still double-buffered by
    # the default pipeline (acceptable cost -- already accounted in the TM budget).
    out_flat = pl.pallas_call(
        _transition_kernel,
        out_shape=jax.ShapeDtypeStruct((M_pad, Cout_pad), jnp.float32),
        grid_spec=pltpu.PrefetchScalarGridSpec(
            num_scalar_prefetch=0,
            grid=grid,
            in_specs=[
                row_spec, row_spec, row_spec, row_spec,
                pl.BlockSpec((1, Cin), lambda i: (0, 0)),
                pl.BlockSpec((1, Cin), lambda i: (0, 0)),
                pl.BlockSpec((Cin, Cout_pad), lambda i: (0, 0)),
                pl.BlockSpec((1, Cout_pad), lambda i: (0, 0)),
            ],
            out_specs=pl.BlockSpec((TM, Cout_pad), lambda i: (i, 0)),
        ),
        compiler_params=pltpu.CompilerParams(
            dimension_semantics=("parallel",),
            vmem_limit_bytes=32 * 1024 * 1024,
        ),
        cost_estimate=cost,
    )(*xs, scale, shift, w, b)

    # Rows are NHWC-ordered; slice off padding and return NCHW to match the
    # PyTorch module's output layout.
    # TODO(synk): in an NHWC-native pipeline, return out_nhwc directly and skip
    # the final transpose (saves a full HBM round-trip over the output).
    out_nhwc = out_flat[:M, :Cout].reshape(N, Hp, Wp, Cout)
    return jnp.transpose(out_nhwc, (0, 3, 1, 2))


def _reference(x, gamma, beta, mean, var, conv_w, conv_b, eps=1e-5):
    # Pure-JAX reference (eval-mode BN), NCHW, op order identical to the module.
    xb = (x - mean[None, :, None, None]) / jnp.sqrt(var[None, :, None, None] + eps)
    xb = xb * gamma[None, :, None, None] + beta[None, :, None, None]
    xb = jnp.maximum(xb, 0.0)
    y = jax.lax.conv_general_dilated(
        xb, conv_w, window_strides=(1, 1), padding="VALID",
        dimension_numbers=("NCHW", "OIHW", "NCHW"))
    y = y + conv_b[None, :, None, None]
    N, C, H, W = y.shape
    y = y.reshape(N, C, H // 2, 2, W // 2, 2).mean(axis=(3, 5))
    return y


if __name__ == "__main__":
    key = jax.random.PRNGKey(0)
    N, Cin, H, W = 2, 4, 16, 16
    Cout = 8

    k = jax.random.split(key, 7)
    x = jax.random.normal(k[0], (N, Cin, H, W), dtype=jnp.float32)
    gamma = jax.random.normal(k[1], (Cin,), dtype=jnp.float32) * 0.1 + 1.0
    beta = jax.random.normal(k[2], (Cin,), dtype=jnp.float32) * 0.1
    running_mean = jax.random.normal(k[3], (Cin,), dtype=jnp.float32) * 0.1
    running_var = jnp.abs(jax.random.normal(k[4], (Cin,), dtype=jnp.float32)) * 0.1 + 1.0
    conv_w = jax.random.normal(k[5], (Cout, Cin, 1, 1), dtype=jnp.float32) * 0.1
    conv_b = jax.random.normal(k[6], (Cout,), dtype=jnp.float32) * 0.1

    ref = _reference(x, gamma, beta, running_mean, running_var, conv_w, conv_b)

    # f32 path -- exact check against the reference.
    out = transition_layer(x, gamma, beta, running_mean, running_var,
                           conv_w, conv_b)
    out = jax.block_until_ready(out)
    assert out.shape == (N, Cout, H // 2, W // 2), out.shape
    assert jnp.allclose(out, ref, atol=1e-5, rtol=1e-5), "f32 mismatch vs reference"

    # bf16 input/weight path (halved HBM traffic, f32 accumulation) -- loose tol.
    out_bf16 = transition_layer(x, gamma, beta, running_mean, running_var,
                                conv_w, conv_b, compute_dtype=jnp.bfloat16)
    out_bf16 = jax.block_until_ready(out_bf16)
    assert jnp.allclose(out_bf16, ref, atol=3e-2, rtol=3e-2), "bf16 mismatch vs reference"

    print("KERNEL_OK")
</pallas_src>

<mosaic_0001>
module attributes {stable_mosaic.version = 11 : i64} {
  func.func @_transition_kernel(%arg0: i32, %arg1: memref<128x4xf32, #tpu.memory_space<vmem>>, %arg2: memref<128x4xf32, #tpu.memory_space<vmem>>, %arg3: memref<128x4xf32, #tpu.memory_space<vmem>>, %arg4: memref<128x4xf32, #tpu.memory_space<vmem>>, %arg5: memref<1x4xf32, #tpu.memory_space<vmem>>, %arg6: memref<1x4xf32, #tpu.memory_space<vmem>>, %arg7: memref<4x128xf32, #tpu.memory_space<vmem>>, %arg8: memref<1x128xf32, #tpu.memory_space<vmem>>, %arg9: memref<128x128xf32, #tpu.memory_space<vmem>>) attributes {dimension_semantics = [#tpu.dimension_semantics<parallel>], iteration_bounds = array<i64: 1>, scalar_prefetch = 0 : i64, scratch_operands = 0 : i64, tpu.core_type = #tpu.core_type<tc>, window_params = [{transform_indices = @transform_0, window_bounds = array<i64: 128, 4>}, {transform_indices = @transform_1, window_bounds = array<i64: 128, 4>}, {transform_indices = @transform_2, window_bounds = array<i64: 128, 4>}, {transform_indices = @transform_3, window_bounds = array<i64: 128, 4>}, {pipeline_mode = #tpu.pipeline_mode<synchronous>, transform_indices = @transform_4, window_bounds = array<i64: 1, 4>}, {pipeline_mode = #tpu.pipeline_mode<synchronous>, transform_indices = @transform_5, window_bounds = array<i64: 1, 4>}, {pipeline_mode = #tpu.pipeline_mode<synchronous>, transform_indices = @transform_6, window_bounds = array<i64: 4, 128>}, {pipeline_mode = #tpu.pipeline_mode<synchronous>, transform_indices = @transform_7, window_bounds = array<i64: 1, 128>}, {transform_indices = @transform_8, window_bounds = array<i64: 128, 128>}]} {
    %c0 = arith.constant 0 : index
    %c0_0 = arith.constant 0 : index
    %0 = vector.load %arg5[%c0, %c0_0] : memref<1x4xf32, #tpu.memory_space<vmem>>, vector<1x4xf32>
    %c0_1 = arith.constant 0 : index
    %c0_2 = arith.constant 0 : index
    %1 = vector.load %arg6[%c0_1, %c0_2] : memref<1x4xf32, #tpu.memory_space<vmem>>, vector<1x4xf32>
    %c0_3 = arith.constant 0 : index
    %c0_4 = arith.constant 0 : index
    %2 = vector.load %arg1[%c0_3, %c0_4] : memref<128x4xf32, #tpu.memory_space<vmem>>, vector<128x4xf32>
    %3 = vector.broadcast %0 : vector<1x4xf32> to vector<128x4xf32>
    %4 = arith.mulf %2, %3 : vector<128x4xf32>
    %5 = vector.broadcast %1 : vector<1x4xf32> to vector<128x4xf32>
    %6 = arith.addf %4, %5 : vector<128x4xf32>
    %cst = arith.constant 0.000000e+00 : f32
    %7 = vector.broadcast %cst : f32 to vector<128x4xf32>
    %8 = arith.maximumf %6, %7 : vector<128x4xf32>
    %c0_5 = arith.constant 0 : index
    %c0_6 = arith.constant 0 : index
    %9 = vector.load %arg2[%c0_5, %c0_6] : memref<128x4xf32, #tpu.memory_space<vmem>>, vector<128x4xf32>
    %10 = vector.broadcast %0 : vector<1x4xf32> to vector<128x4xf32>
    %11 = arith.mulf %9, %10 : vector<128x4xf32>
    %12 = vector.broadcast %1 : vector<1x4xf32> to vector<128x4xf32>
    %13 = arith.addf %11, %12 : vector<128x4xf32>
    %cst_7 = arith.constant 0.000000e+00 : f32
    %14 = vector.broadcast %cst_7 : f32 to vector<128x4xf32>
    %15 = arith.maximumf %13, %14 : vector<128x4xf32>
    %16 = arith.addf %8, %15 : vector<128x4xf32>
    %c0_8 = arith.constant 0 : index
    %c0_9 = arith.constant 0 : index
    %17 = vector.load %arg3[%c0_8, %c0_9] : memref<128x4xf32, #tpu.memory_space<vmem>>, vector<128x4xf32>
    %18 = vector.broadcast %0 : vector<1x4xf32> to vector<128x4xf32>
    %19 = arith.mulf %17, %18 : vector<128x4xf32>
    %20 = vector.broadcast %1 : vector<1x4xf32> to vector<128x4xf32>
    %21 = arith.addf %19, %20 : vector<128x4xf32>
    %cst_10 = arith.constant 0.000000e+00 : f32
    %22 = vector.broadcast %cst_10 : f32 to vector<128x4xf32>
    %23 = arith.maximumf %21, %22 : vector<128x4xf32>
    %24 = arith.addf %16, %23 : vector<128x4xf32>
    %c0_11 = arith.constant 0 : index
    %c0_12 = arith.constant 0 : index
    %25 = vector.load %arg4[%c0_11, %c0_12] : memref<128x4xf32, #tpu.memory_space<vmem>>, vector<128x4xf32>
    %26 = vector.broadcast %0 : vector<1x4xf32> to vector<128x4xf32>
    %27 = arith.mulf %25, %26 : vector<128x4xf32>
    %28 = vector.broadcast %1 : vector<1x4xf32> to vector<128x4xf32>
    %29 = arith.addf %27, %28 : vector<128x4xf32>
    %cst_13 = arith.constant 0.000000e+00 : f32
    %30 = vector.broadcast %cst_13 : f32 to vector<128x4xf32>
    %31 = arith.maximumf %29, %30 : vector<128x4xf32>
    %32 = arith.addf %24, %31 : vector<128x4xf32>
    %c0_14 = arith.constant 0 : index
    %c0_15 = arith.constant 0 : index
    %33 = vector.load %arg7[%c0_14, %c0_15] : memref<4x128xf32, #tpu.memory_space<vmem>>, vector<4x128xf32>
    %cst_16 = arith.constant dense<0.000000e+00> : vector<128x128xf32>
    %34 = tpu.matmul %32, %33, %cst_16 {dimension_numbers = #tpu.dot_dimension_numbers<[1], [0], [0], [1], [0, 0, 1, 1], [], []>} : vector<128x4xf32>, vector<4x128xf32>, vector<128x128xf32> -> vector<128x128xf32>
    %c0_17 = arith.constant 0 : index
    %c0_18 = arith.constant 0 : index
    %35 = vector.load %arg8[%c0_17, %c0_18] : memref<1x128xf32, #tpu.memory_space<vmem>>, vector<1x128xf32>
    %36 = vector.broadcast %35 : vector<1x128xf32> to vector<128x128xf32>
    %37 = arith.addf %34, %36 : vector<128x128xf32>
    %c0_19 = arith.constant 0 : index
    %c0_20 = arith.constant 0 : index
    %38 = vector.load %arg9[%c0_19, %c0_20] : memref<128x128xf32, #tpu.memory_space<vmem>>, vector<128x128xf32>
    tpu.vector_store %arg9[%c0_19, %c0_20], %37 {strides = array<i32>} : memref<128x128xf32, #tpu.memory_space<vmem>>, vector<128x128xf32>,
    return
  }
  func.func @transform_0(%arg0: i32) -> (i32, i32) {
    %c0_i32 = arith.constant 0 : i32
    %c0_i32_0 = arith.constant 0 : i32
    return %arg0, %c0_i32 : i32, i32
  }
  func.func @transform_1(%arg0: i32) -> (i32, i32) {
    %c0_i32 = arith.constant 0 : i32
    %c0_i32_0 = arith.constant 0 : i32
    return %arg0, %c0_i32 : i32, i32
  }
  func.func @transform_2(%arg0: i32) -> (i32, i32) {
    %c0_i32 = arith.constant 0 : i32
    %c0_i32_0 = arith.constant 0 : i32
    return %arg0, %c0_i32 : i32, i32
  }
  func.func @transform_3(%arg0: i32) -> (i32, i32) {
    %c0_i32 = arith.constant 0 : i32
    %c0_i32_0 = arith.constant 0 : i32
    return %arg0, %c0_i32 : i32, i32
  }
  func.func @transform_4(%arg0: i32) -> (i32, i32) {
    %c0_i32 = arith.constant 0 : i32
    %c0_i32_0 = arith.constant 0 : i32
    %c0_i32_1 = arith.constant 0 : i32
    return %c0_i32, %c0_i32_0 : i32, i32
  }
  func.func @transform_5(%arg0: i32) -> (i32, i32) {
    %c0_i32 = arith.constant 0 : i32
    %c0_i32_0 = arith.constant 0 : i32
    %c0_i32_1 = arith.constant 0 : i32
    return %c0_i32, %c0_i32_0 : i32, i32
  }
  func.func @transform_6(%arg0: i32) -> (i32, i32) {
    %c0_i32 = arith.constant 0 : i32
    %c0_i32_0 = arith.constant 0 : i32
    %c0_i32_1 = arith.constant 0 : i32
    return %c0_i32, %c0_i32_0 : i32, i32
  }
  func.func @transform_7(%arg0: i32) -> (i32, i32) {
    %c0_i32 = arith.constant 0 : i32
    %c0_i32_0 = arith.constant 0 : i32
    %c0_i32_1 = arith.constant 0 : i32
    return %c0_i32, %c0_i32_0 : i32, i32
  }
  func.func @transform_8(%arg0: i32) -> (i32, i32) {
    %c0_i32 = arith.constant 0 : i32
    %c0_i32_0 = arith.constant 0 : i32
    return %arg0, %c0_i32 : i32, i32
  }
}

</mosaic_0001>

<llo_original>
// kernel: tpu_custom_call.1
$region0: #{tpu_custom_call.1}
  #allocation0 [shape = 'u32[]', space=smem, size = 0x4, offset = 0x4, fixed_abs, tag = 'smem constant byte address 0x4 - core index']
  #allocation1 [shape = 'u32[72,128]{1,0:T(1,128)}', space=vmem, size = 0x9000, scoped, tag = 'internal scratch']
  %s0 = inlined_call_operand.vmem [shape: f32[128,4], index: 0, kind: input, shape index: {}]
  %s1 = inlined_call_operand.vmem [shape: f32[128,4], index: 1, kind: input, shape index: {}]
  %s2 = inlined_call_operand.vmem [shape: f32[128,4], index: 2, kind: input, shape index: {}]
  %s3 = inlined_call_operand.vmem [shape: f32[128,4], index: 3, kind: input, shape index: {}]
  %s4 = inlined_call_operand.vmem [shape: f32[1,4], index: 4, kind: input, shape index: {}]
  %s5 = inlined_call_operand.vmem [shape: f32[1,4], index: 5, kind: input, shape index: {}]
  %s6 = inlined_call_operand.vmem [shape: f32[4,128], index: 6, kind: input, shape index: {}]
  %s7 = inlined_call_operand.vmem [shape: f32[1,128], index: 7, kind: input, shape index: {}]
  %s8 = inlined_call_operand.hbm [shape: f32[128,128], index: 8, kind: output, shape index: {}]
  %s9 = sld [smem:[#allocation0]]
  $region42: #{tpu_custom_call.1} parent=0
    _
  %s11 = ssub.s32 1, %s9
  %s12 = scalar_select 0, %s11, %s9
  $region1: #{tpu_custom_call.1} parent=0
    #allocation2 [shape = 'u8[65536]{0}', space=vmem, size = 0x10000, scoped, tag = 'output window, operand 0, single buffered']
    #allocation3 [shape = 's32[1]{0}', space=sflag, size = 0x4, scoped, tag = 'scoped memory for tpu_custom_call.1']
    %13 = vsyncpa [#allocation3], 0
    // Predicated region
    $region2: #{tpu_custom_call.1} parent=1 // pred_check
      _
    $region3: #{tpu_custom_call.1} parent=1 // pred_check_branch
      %15 = sbr.rel (0) target = $region5
    $region4: #{tpu_custom_call.1} parent=1 // pred_region
      _
    $region5: #{tpu_custom_call.1} parent=1 // pred_fallthru
      _
    // Predicated region
    $region6: #{tpu_custom_call.1} parent=1 // pred_check
      _
    $region7: #{tpu_custom_call.1} parent=1 // pred_check_branch
      %17 = sbr.rel (0) target = $region9
    $region8: #{tpu_custom_call.1} parent=1 // pred_region
      _
    $region9: #{tpu_custom_call.1} parent=1 // pred_fallthru
      _
    // Predicated region
    $region10: #{tpu_custom_call.1} parent=1 // pred_check
      _
    $region11: #{tpu_custom_call.1} parent=1 // pred_check_branch
      %19 = sbr.rel (0) target = $region13
    $region12: #{tpu_custom_call.1} parent=1 // pred_region
      _
    $region13: #{tpu_custom_call.1} parent=1 // pred_fallthru
      _
    // Predicated region
    $region14: #{tpu_custom_call.1} parent=1 // pred_check
      _
    $region15: #{tpu_custom_call.1} parent=1 // pred_check_branch
      %21 = sbr.rel (0) target = $region17
    $region16: #{tpu_custom_call.1} parent=1 // pred_region
      _
    $region17: #{tpu_custom_call.1} parent=1 // pred_fallthru
      _
    // Predicated region
    $region18: #{tpu_custom_call.1} parent=1 // pred_check
      _
    $region19: #{tpu_custom_call.1} parent=1 // pred_check_branch
      %23 = sbr.rel (0) target = $region21
    $region20: #{tpu_custom_call.1} parent=1 // pred_region
      _
    $region21: #{tpu_custom_call.1} parent=1 // pred_fallthru
      _
    // Predicated region
    $region22: #{tpu_custom_call.1} parent=1 // pred_check
      _
    $region23: #{tpu_custom_call.1} parent=1 // pred_check_branch
      %25 = sbr.rel (0) target = $region25
    $region24: #{tpu_custom_call.1} parent=1 // pred_region
      _
    $region25: #{tpu_custom_call.1} parent=1 // pred_fallthru
      _
    // Predicated region
    $region26: #{tpu_custom_call.1} parent=1 // pred_check
      _
    $region27: #{tpu_custom_call.1} parent=1 // pred_check_branch
      %27 = sbr.rel (0) target = $region29
    $region28: #{tpu_custom_call.1} parent=1 // pred_region
      _
    $region29: #{tpu_custom_call.1} parent=1 // pred_fallthru
      _
    // Predicated region
    $region30: #{tpu_custom_call.1} parent=1 // pred_check
      _
    $region31: #{tpu_custom_call.1} parent=1 // pred_check_branch
      %29 = sbr.rel (0) target = $region33
    $region32: #{tpu_custom_call.1} parent=1 // pred_region
      _
    $region33: #{tpu_custom_call.1} parent=1 // pred_fallthru
      _
    %v30 = vld [vmem:[%s4] sm:$0x1]
    %v31 = vld [vmem:[%s5] sm:$0x1]
    %v32 = vld [vmem:[%s0] sm:$0xff]
    %v33 = vld [vmem:[%s0 + $0x8] sm:$0xff]
    %v34 = vld [vmem:[%s0 + $0x10] sm:$0xff]
    %v35 = vld [vmem:[%s0 + $0x18] sm:$0xff]
    %v36 = vld [vmem:[%s0 + $0x20] sm:$0xff]
    %v37 = vld [vmem:[%s0 + $0x28] sm:$0xff]
    %v38 = vld [vmem:[%s0 + $0x30] sm:$0xff]
    %v39 = vld [vmem:[%s0 + $0x38] sm:$0xff]
    %v40 = vld [vmem:[%s0 + $0x40] sm:$0xff]
    %v41 = vld [vmem:[%s0 + $0x48] sm:$0xff]
    %v42 = vld [vmem:[%s0 + $0x50] sm:$0xff]
    %v43 = vld [vmem:[%s0 + $0x58] sm:$0xff]
    %v44 = vld [vmem:[%s0 + $0x60] sm:$0xff]
    %v45 = vld [vmem:[%s0 + $0x68] sm:$0xff]
    %v46 = vld [vmem:[%s0 + $0x70] sm:$0xff]
    %v47 = vld [vmem:[%s0 + $0x78] sm:$0xff]
    %v49 = vperm.slane %v30, 0
    %v51 = vmul.f32 %v32, %v49
    %v52 = vmul.f32 %v33, %v49
    %v53 = vmul.f32 %v34, %v49
    %v54 = vmul.f32 %v35, %v49
    %v55 = vmul.f32 %v36, %v49
    %v56 = vmul.f32 %v37, %v49
    %v57 = vmul.f32 %v38, %v49
    %v58 = vmul.f32 %v39, %v49
    %v59 = vmul.f32 %v40, %v49
    %v60 = vmul.f32 %v41, %v49
    %v61 = vmul.f32 %v42, %v49
    %v62 = vmul.f32 %v43, %v49
    %v63 = vmul.f32 %v44, %v49
    %v64 = vmul.f32 %v45, %v49
    %v65 = vmul.f32 %v46, %v49
    %v66 = vmul.f32 %v47, %v49
    %v68 = vperm.slane %v31, 0
    %v70 = vadd.f32 %v51, %v68
    %v71 = vadd.f32 %v52, %v68
    %v72 = vadd.f32 %v53, %v68
    %v73 = vadd.f32 %v54, %v68
    %v74 = vadd.f32 %v55, %v68
    %v75 = vadd.f32 %v56, %v68
    %v76 = vadd.f32 %v57, %v68
    %v77 = vadd.f32 %v58, %v68
    %v78 = vadd.f32 %v59, %v68
    %v79 = vadd.f32 %v60, %v68
    %v80 = vadd.f32 %v61, %v68
    %v81 = vadd.f32 %v62, %v68
    %v82 = vadd.f32 %v63, %v68
    %v83 = vadd.f32 %v64, %v68
    %v84 = vadd.f32 %v65, %v68
    %v85 = vadd.f32 %v66, %v68
    %v86 = vmax.f32 %v70, 0.0
    %v87 = vmax.f32 %v71, 0.0
    %v88 = vmax.f32 %v72, 0.0
    %v89 = vmax.f32 %v73, 0.0
    %v90 = vmax.f32 %v74, 0.0
    %v91 = vmax.f32 %v75, 0.0
    %v92 = vmax.f32 %v76, 0.0
    %v93 = vmax.f32 %v77, 0.0
    %v94 = vmax.f32 %v78, 0.0
    %v95 = vmax.f32 %v79, 0.0
    %v96 = vmax.f32 %v80, 0.0
    %v97 = vmax.f32 %v81, 0.0
    %v98 = vmax.f32 %v82, 0.0
    %v99 = vmax.f32 %v83, 0.0
    %v100 = vmax.f32 %v84, 0.0
    %v101 = vmax.f32 %v85, 0.0
    %v102 = vld [vmem:[%s1] sm:$0xff]
    %v103 = vld [vmem:[%s1 + $0x8] sm:$0xff]
    %v104 = vld [vmem:[%s1 + $0x10] sm:$0xff]
    %v105 = vld [vmem:[%s1 + $0x18] sm:$0xff]
    %v106 = vld [vmem:[%s1 + $0x20] sm:$0xff]
    %v107 = vld [vmem:[%s1 + $0x28] sm:$0xff]
    %v108 = vld [vmem:[%s1 + $0x30] sm:$0xff]
    %v109 = vld [vmem:[%s1 + $0x38] sm:$0xff]
    %v110 = vld [vmem:[%s1 + $0x40] sm:$0xff]
    %v111 = vld [vmem:[%s1 + $0x48] sm:$0xff]
    %v112 = vld [vmem:[%s1 + $0x50] sm:$0xff]
    %v113 = vld [vmem:[%s1 + $0x58] sm:$0xff]
    %v114 = vld [vmem:[%s1 + $0x60] sm:$0xff]
    %v115 = vld [vmem:[%s1 + $0x68] sm:$0xff]
    %v116 = vld [vmem:[%s1 + $0x70] sm:$0xff]
    %v117 = vld [vmem:[%s1 + $0x78] sm:$0xff]
    %v118 = vmul.f32 %v102, %v49
    %v119 = vmul.f32 %v103, %v49
    %v120 = vmul.f32 %v104, %v49
    %v121 = vmul.f32 %v105, %v49
    %v122 = vmul.f32 %v106, %v49
    %v123 = vmul.f32 %v107, %v49
    %v124 = vmul.f32 %v108, %v49
    %v125 = vmul.f32 %v109, %v49
    %v126 = vmul.f32 %v110, %v49
    %v127 = vmul.f32 %v111, %v49
    %v128 = vmul.f32 %v112, %v49
    %v129 = vmul.f32 %v113, %v49
    %v130 = vmul.f32 %v114, %v49
    %v131 = vmul.f32 %v115, %v49
    %v132 = vmul.f32 %v116, %v49
    %v133 = vmul.f32 %v117, %v49
    %v134 = vadd.f32 %v118, %v68
    %v135 = vadd.f32 %v119, %v68
    %v136 = vadd.f32 %v120, %v68
    %v137 = vadd.f32 %v121, %v68
    %v138 = vadd.f32 %v122, %v68
    %v139 = vadd.f32 %v123, %v68
    %v140 = vadd.f32 %v124, %v68
    %v141 = vadd.f32 %v125, %v68
    %v142 = vadd.f32 %v126, %v68
    %v143 = vadd.f32 %v127, %v68
    %v144 = vadd.f32 %v128, %v68
    %v145 = vadd.f32 %v129, %v68
    %v146 = vadd.f32 %v130, %v68
    %v147 = vadd.f32 %v131, %v68
    %v148 = vadd.f32 %v132, %v68
    %v149 = vadd.f32 %v133, %v68
    %v150 = vmax.f32 %v134, 0.0
    %v151 = vmax.f32 %v135, 0.0
    %v152 = vmax.f32 %v136, 0.0
    %v153 = vmax.f32 %v137, 0.0
    %v154 = vmax.f32 %v138, 0.0
    %v155 = vmax.f32 %v139, 0.0
    %v156 = vmax.f32 %v140, 0.0
    %v157 = vmax.f32 %v141, 0.0
    %v158 = vmax.f32 %v142, 0.0
    %v159 = vmax.f32 %v143, 0.0
    %v160 = vmax.f32 %v144, 0.0
    %v161 = vmax.f32 %v145, 0.0
    %v162 = vmax.f32 %v146, 0.0
    %v163 = vmax.f32 %v147, 0.0
    %v164 = vmax.f32 %v148, 0.0
    %v165 = vmax.f32 %v149, 0.0
    %v166 = vadd.f32 %v86, %v150
    %v167 = vadd.f32 %v87, %v151
    %v168 = vadd.f32 %v88, %v152
    %v169 = vadd.f32 %v89, %v153
    %v170 = vadd.f32 %v90, %v154
    %v171 = vadd.f32 %v91, %v155
    %v172 = vadd.f32 %v92, %v156
    %v173 = vadd.f32 %v93, %v157
    %v174 = vadd.f32 %v94, %v158
    %v175 = vadd.f32 %v95, %v159
    %v176 = vadd.f32 %v96, %v160
    %v177 = vadd.f32 %v97, %v161
    %v178 = vadd.f32 %v98, %v162
    %v179 = vadd.f32 %v99, %v163
    %v180 = vadd.f32 %v100, %v164
    %v181 = vadd.f32 %v101, %v165
    %v182 = vld [vmem:[%s2] sm:$0xff]
    %v183 = vld [vmem:[%s2 + $0x8] sm:$0xff]
    %v184 = vld [vmem:[%s2 + $0x10] sm:$0xff]
    %v185 = vld [vmem:[%s2 + $0x18] sm:$0xff]
    %v186 = vld [vmem:[%s2 + $0x20] sm:$0xff]
    %v187 = vld [vmem:[%s2 + $0x28] sm:$0xff]
    %v188 = vld [vmem:[%s2 + $0x30] sm:$0xff]
    %v189 = vld [vmem:[%s2 + $0x38] sm:$0xff]
    %v190 = vld [vmem:[%s2 + $0x40] sm:$0xff]
    %v191 = vld [vmem:[%s2 + $0x48] sm:$0xff]
    %v192 = vld [vmem:[%s2 + $0x50] sm:$0xff]
    %v193 = vld [vmem:[%s2 + $0x58] sm:$0xff]
    %v194 = vld [vmem:[%s2 + $0x60] sm:$0xff]
    %v195 = vld [vmem:[%s2 + $0x68] sm:$0xff]
    %v196 = vld [vmem:[%s2 + $0x70] sm:$0xff]
    %v197 = vld [vmem:[%s2 + $0x78] sm:$0xff]
    %v198 = vmul.f32 %v182, %v49
    %v199 = vmul.f32 %v183, %v49
    %v200 = vmul.f32 %v184, %v49
    %v201 = vmul.f32 %v185, %v49
    %v202 = vmul.f32 %v186, %v49
    %v203 = vmul.f32 %v187, %v49
    %v204 = vmul.f32 %v188, %v49
    %v205 = vmul.f32 %v189, %v49
    %v206 = vmul.f32 %v190, %v49
    %v207 = vmul.f32 %v191, %v49
    %v208 = vmul.f32 %v192, %v49
    %v209 = vmul.f32 %v193, %v49
    %v210 = vmul.f32 %v194, %v49
    %v211 = vmul.f32 %v195, %v49
    %v212 = vmul.f32 %v196, %v49
    %v213 = vmul.f32 %v197, %v49
    %v214 = vadd.f32 %v198, %v68
    %v215 = vadd.f32 %v199, %v68
    %v216 = vadd.f32 %v200, %v68
    %v217 = vadd.f32 %v201, %v68
    %v218 = vadd.f32 %v202, %v68
    %v219 = vadd.f32 %v203, %v68
    %v220 = vadd.f32 %v204, %v68
    %v221 = vadd.f32 %v205, %v68
    %v222 = vadd.f32 %v206, %v68
    %v223 = vadd.f32 %v207, %v68
    %v224 = vadd.f32 %v208, %v68
    %v225 = vadd.f32 %v209, %v68
    %v226 = vadd.f32 %v210, %v68
    %v227 = vadd.f32 %v211, %v68
    %v228 = vadd.f32 %v212, %v68
    %v229 = vadd.f32 %v213, %v68
    %v230 = vmax.f32 %v214, 0.0
    %v231 = vmax.f32 %v215, 0.0
    %v232 = vmax.f32 %v216, 0.0
    %v233 = vmax.f32 %v217, 0.0
    %v234 = vmax.f32 %v218, 0.0
    %v235 = vmax.f32 %v219, 0.0
    %v236 = vmax.f32 %v220, 0.0
    %v237 = vmax.f32 %v221, 0.0
    %v238 = vmax.f32 %v222, 0.0
    %v239 = vmax.f32 %v223, 0.0
    %v240 = vmax.f32 %v224, 0.0
    %v241 = vmax.f32 %v225, 0.0
    %v242 = vmax.f32 %v226, 0.0
    %v243 = vmax.f32 %v227, 0.0
    %v244 = vmax.f32 %v228, 0.0
    %v245 = vmax.f32 %v229, 0.0
    %v246 = vadd.f32 %v166, %v230
    %v247 = vadd.f32 %v167, %v231
    %v248 = vadd.f32 %v168, %v232
    %v249 = vadd.f32 %v169, %v233
    %v250 = vadd.f32 %v170, %v234
    %v251 = vadd.f32 %v171, %v235
    %v252 = vadd.f32 %v172, %v236
    %v253 = vadd.f32 %v173, %v237
    %v254 = vadd.f32 %v174, %v238
    %v255 = vadd.f32 %v175, %v239
    %v256 = vadd.f32 %v176, %v240
    %v257 = vadd.f32 %v177, %v241
    %v258 = vadd.f32 %v178, %v242
    %v259 = vadd.f32 %v179, %v243
    %v260 = vadd.f32 %v180, %v244
    %v261 = vadd.f32 %v181, %v245
    %v262 = vld [vmem:[%s3] sm:$0xff]
    %v263 = vld [vmem:[%s3 + $0x8] sm:$0xff]
    %v264 = vld [vmem:[%s3 + $0x10] sm:$0xff]
    %v265 = vld [vmem:[%s3 + $0x18] sm:$0xff]
    %v266 = vld [vmem:[%s3 + $0x20] sm:$0xff]
    %v267 = vld [vmem:[%s3 + $0x28] sm:$0xff]
    %v268 = vld [vmem:[%s3 + $0x30] sm:$0xff]
    %v269 = vld [vmem:[%s3 + $0x38] sm:$0xff]
    %v270 = vld [vmem:[%s3 + $0x40] sm:$0xff]
    %v271 = vld [vmem:[%s3 + $0x48] sm:$0xff]
    %v272 = vld [vmem:[%s3 + $0x50] sm:$0xff]
    %v273 = vld [vmem:[%s3 + $0x58] sm:$0xff]
    %v274 = vld [vmem:[%s3 + $0x60] sm:$0xff]
    %v275 = vld [vmem:[%s3 + $0x68] sm:$0xff]
    %v276 = vld [vmem:[%s3 + $0x70] sm:$0xff]
    %v277 = vld [vmem:[%s3 + $0x78] sm:$0xff]
    %v278 = vmul.f32 %v262, %v49
    %v279 = vmul.f32 %v263, %v49
    %v280 = vmul.f32 %v264, %v49
    %v281 = vmul.f32 %v265, %v49
    %v282 = vmul.f32 %v266, %v49
    %v283 = vmul.f32 %v267, %v49
    %v284 = vmul.f32 %v268, %v49
    %v285 = vmul.f32 %v269, %v49
    %v286 = vmul.f32 %v270, %v49
    %v287 = vmul.f32 %v271, %v49
    %v288 = vmul.f32 %v272, %v49
    %v289 = vmul.f32 %v273, %v49
    %v290 = vmul.f32 %v274, %v49
    %v291 = vmul.f32 %v275, %v49
    %v292 = vmul.f32 %v276, %v49
    %v293 = vmul.f32 %v277, %v49
    %v294 = vadd.f32 %v278, %v68
    %v295 = vadd.f32 %v279, %v68
    %v296 = vadd.f32 %v280, %v68
    %v297 = vadd.f32 %v281, %v68
    %v298 = vadd.f32 %v282, %v68
    %v299 = vadd.f32 %v283, %v68
    %v300 = vadd.f32 %v284, %v68
    %v301 = vadd.f32 %v285, %v68
    %v302 = vadd.f32 %v286, %v68
    %v303 = vadd.f32 %v287, %v68
    %v304 = vadd.f32 %v288, %v68
    %v305 = vadd.f32 %v289, %v68
    %v306 = vadd.f32 %v290, %v68
    %v307 = vadd.f32 %v291, %v68
    %v308 = vadd.f32 %v292, %v68
    %v309 = vadd.f32 %v293, %v68
    %v310 = vmax.f32 %v294, 0.0
    %v311 = vmax.f32 %v295, 0.0
    %v312 = vmax.f32 %v296, 0.0
    %v313 = vmax.f32 %v297, 0.0
    %v314 = vmax.f32 %v298, 0.0
    %v315 = vmax.f32 %v299, 0.0
    %v316 = vmax.f32 %v300, 0.0
    %v317 = vmax.f32 %v301, 0.0
    %v318 = vmax.f32 %v302, 0.0
    %v319 = vmax.f32 %v303, 0.0
    %v320 = vmax.f32 %v304, 0.0
    %v321 = vmax.f32 %v305, 0.0
    %v322 = vmax.f32 %v306, 0.0
    %v323 = vmax.f32 %v307, 0.0
    %v324 = vmax.f32 %v308, 0.0
    %v325 = vmax.f32 %v309, 0.0
    %v326 = vadd.f32 %v246, %v310
    %v327 = vadd.f32 %v247, %v311
    %v328 = vadd.f32 %v248, %v312
    %v329 = vadd.f32 %v249, %v313
    %v330 = vadd.f32 %v250, %v314
    %v331 = vadd.f32 %v251, %v315
    %v332 = vadd.f32 %v252, %v316
    %v333 = vadd.f32 %v253, %v317
    %v334 = vadd.f32 %v254, %v318
    %v335 = vadd.f32 %v255, %v319
    %v336 = vadd.f32 %v256, %v320
    %v337 = vadd.f32 %v257, %v321
    %v338 = vadd.f32 %v258, %v322
    %v339 = vadd.f32 %v259, %v323
    %v340 = vadd.f32 %v260, %v324
    %v341 = vadd.f32 %v261, %v325
    %v342 = vld [vmem:[%s6] sm:$0xf]
    %v343 = vld [vmem:[%s7] sm:$0x1]
    %v345 = vperm.slane %v343, 0
    %vm347 = vcmask 31744
    %v349 = vsel %vm347, %v326, 0
    %v352 = vsel %vm347, %v327, 0
    %v355 = vsel %vm347, %v328, 0
    %v358 = vsel %vm347, %v329, 0
    %v361 = vsel %vm347, %v330, 0
    %v364 = vsel %vm347, %v331, 0
    %v367 = vsel %vm347, %v332, 0
    %v370 = vsel %vm347, %v333, 0
    %v373 = vsel %vm347, %v334, 0
    %v376 = vsel %vm347, %v335, 0
    %v379 = vsel %vm347, %v336, 0
    %v382 = vsel %vm347, %v337, 0
    %v385 = vsel %vm347, %v338, 0
    %v388 = vsel %vm347, %v339, 0
    %v391 = vsel %vm347, %v340, 0
    %v394 = vsel %vm347, %v341, 0
    %vm396 = vcmask 1043456
    %v398 = vsel %vm396, %v342, 0
    %400 = vmatpush.msra.mxu0 0.0
    %401 = vmatpush.msra.mxu0 0.0
    %402 = vmatpush.msra.mxu0 0.0
    %403 = vmatpush.msra.mxu0 0.0
    %404 = vmatpush.msra.mxu0 0.0
    %405 = vmatpush.msra.mxu0 0.0
    %406 = vmatpush.msra.mxu0 0.0
    %407 = vmatpush.msra.mxu0 0.0
    %408 = vmatpush.msra.mxu0 0.0
    %409 = vmatpush.msra.mxu0 0.0
    %410 = vmatpush.msra.mxu0 0.0
    %411 = vmatpush.msra.mxu0 0.0
    %412 = vmatpush.msra.mxu0 0.0
    %413 = vmatpush.msra.mxu0 0.0
    %414 = vmatpush.msra.mxu0 0.0
    %415 = vmatpush.msra.mxu0 %v398
    %416 = vmatmul.f32.gmra.mxu0 %v349
    %v417 = vpop.f32.mrf.mxu0
    %v418 = vadd.f32 %v345, %v417
    %419 = vmatmul.f32.gmra.mxu0 %v352
    %v420 = vpop.f32.mrf.mxu0
    %v421 = vadd.f32 %v345, %v420
    %422 = vmatmul.f32.gmra.mxu0 %v355
    %v423 = vpop.f32.mrf.mxu0
    %v424 = vadd.f32 %v345, %v423
    %425 = vmatmul.f32.gmra.mxu0 %v358
    %v426 = vpop.f32.mrf.mxu0
    %v427 = vadd.f32 %v345, %v426
    %428 = vmatmul.f32.gmra.mxu0 %v361
    %v429 = vpop.f32.mrf.mxu0
    %v430 = vadd.f32 %v345, %v429
    %431 = vmatmul.f32.gmra.mxu0 %v364
    %v432 = vpop.f32.mrf.mxu0
    %v433 = vadd.f32 %v345, %v432
    %434 = vmatmul.f32.gmra.mxu0 %v367
    %v435 = vpop.f32.mrf.mxu0
    %v436 = vadd.f32 %v345, %v435
    %437 = vmatmul.f32.gmra.mxu0 %v370
    %v438 = vpop.f32.mrf.mxu0
    %v439 = vadd.f32 %v345, %v438
    %440 = vmatmul.f32.gmra.mxu0 %v373
    %v441 = vpop.f32.mrf.mxu0
    %v442 = vadd.f32 %v345, %v441
    %443 = vmatmul.f32.gmra.mxu0 %v376
    %v444 = vpop.f32.mrf.mxu0
    %v445 = vadd.f32 %v345, %v444
    %446 = vmatmul.f32.gmra.mxu0 %v379
    %v447 = vpop.f32.mrf.mxu0
    %v448 = vadd.f32 %v345, %v447
    %449 = vmatmul.f32.gmra.mxu0 %v382
    %v450 = vpop.f32.mrf.mxu0
    %v451 = vadd.f32 %v345, %v450
    %452 = vmatmul.f32.gmra.mxu0 %v385
    %v453 = vpop.f32.mrf.mxu0
    %v454 = vadd.f32 %v345, %v453
    %455 = vmatmul.f32.gmra.mxu0 %v388
    %v456 = vpop.f32.mrf.mxu0
    %v457 = vadd.f32 %v345, %v456
    %458 = vmatmul.f32.gmra.mxu0 %v391
    %v459 = vpop.f32.mrf.mxu0
    %v460 = vadd.f32 %v345, %v459
    %461 = vmatmul.f32.gmra.mxu0 %v394
    %v462 = vpop.f32.mrf.mxu0
    %v463 = vadd.f32 %v345, %v462
    %464 = vdwg.mxu0
    %465 = vst [vmem:[#allocation2] sm:$0xff] %v418
    %466 = vst [vmem:[#allocation2 + $0x8] sm:$0xff] %v421
    %467 = vst [vmem:[#allocation2 + $0x10] sm:$0xff] %v424
    %468 = vst [vmem:[#allocation2 + $0x18] sm:$0xff] %v427
    %469 = vst [vmem:[#allocation2 + $0x20] sm:$0xff] %v430
    %470 = vst [vmem:[#allocation2 + $0x28] sm:$0xff] %v433
    %471 = vst [vmem:[#allocation2 + $0x30] sm:$0xff] %v436
    %472 = vst [vmem:[#allocation2 + $0x38] sm:$0xff] %v439
    %473 = vst [vmem:[#allocation2 + $0x40] sm:$0xff] %v442
    %474 = vst [vmem:[#allocation2 + $0x48] sm:$0xff] %v445
    %475 = vst [vmem:[#allocation2 + $0x50] sm:$0xff] %v448
    %476 = vst [vmem:[#allocation2 + $0x58] sm:$0xff] %v451
    %477 = vst [vmem:[#allocation2 + $0x60] sm:$0xff] %v454
    %478 = vst [vmem:[#allocation2 + $0x68] sm:$0xff] %v457
    %479 = vst [vmem:[#allocation2 + $0x70] sm:$0xff] %v460
    %480 = vst [vmem:[#allocation2 + $0x78] sm:$0xff] %v463
    // Predicated region
    $region34: #{tpu_custom_call.1} parent=1 // pred_check
      _
    $region35: #{tpu_custom_call.1} parent=1 // pred_check_branch
      %482 = sbr.rel (0) target = $region37
    $region36: #{tpu_custom_call.1} parent=1 // pred_region
      %484 = vsyncadd [#allocation3], 0
      %s485 = sshll.u32 [#allocation2], 4
      %s486 = int_to_ptr.vmem [resolvable:$true] %s485
      %s487 = sshll.u32 %s8, 4
      %s488 = int_to_ptr.hbm [resolvable:$true] %s487
      %493 = dma.vmem_to_hbm [thread:$0]  %s486, 2048, %s488, [#allocation3], 128, 128, 8
    $region37: #{tpu_custom_call.1} parent=1 // pred_fallthru
      _
    // Predicated region
    $region38: #{tpu_custom_call.1} parent=1 // pred_check
      _
    $region39: #{tpu_custom_call.1} parent=1 // pred_check_branch
      %495 = sbr.rel (0) target = $region41
    $region40: #{tpu_custom_call.1} parent=1 // pred_region
      %497 = dma.done [#allocation3], 2048
    $region41: #{tpu_custom_call.1} parent=1 // pred_fallthru
      _
    %498 = vsyncpa [#allocation3], 1

</llo_original>
